<compile_context>
chip_gen: v6e
topology: v6e:2x2x1
jax: 0.10.0
libtpu: 0.0.40
codegen_flags: <defaults>
</compile_context>

<pallas_src>
import functools

import jax
import jax.numpy as jnp
from jax.experimental import pallas as pl
from jax.experimental.pallas import tpu as pltpu


# ------------------------------ Tiled linear --------------------------------

def _linear_bias_kernel(x_ref, w_ref, b_ref, o_ref):
    o_ref[...] = (
        jnp.dot(x_ref[...], w_ref[...], preferred_element_type=jnp.float32)
        + b_ref[...].astype(jnp.float32)
    ).astype(o_ref.dtype)


def _linear_nobias_kernel(x_ref, w_ref, o_ref):
    o_ref[...] = jnp.dot(
        x_ref[...], w_ref[...], preferred_element_type=jnp.float32
    ).astype(o_ref.dtype)


def pallas_linear(x2d, w, b=None, *, tm=512, tn=1024):
    """y = x2d @ w (+ b).  x2d: (N, Cin), w: (Cin, Cout), b: (Cout,) or None.

    Rows AND output columns are tiled: the x row-tile stays resident across the
    column sweep while (Cin, tn) weight column blocks stream through VMEM, so a
    large fused-QKV weight never has to be fully resident (v5e 16 MiB scoped
    default / v7x 64 MiB physical budgets).
    """
    n, cin = x2d.shape
    cout = w.shape[1]
    tm = min(n, tm)
    tn = min(cout, tn)
    grid = (pl.cdiv(n, tm), pl.cdiv(cout, tn))
    out_shape = jax.ShapeDtypeStruct((n, cout), x2d.dtype)
    x_spec = pl.BlockSpec((tm, cin), lambda i, j: (i, 0))      # resident over cols
    w_spec = pl.BlockSpec((cin, tn), lambda i, j: (0, j))
    o_spec = pl.BlockSpec((tm, tn), lambda i, j: (i, j))
    cparams = pltpu.CompilerParams(
        dimension_semantics=("parallel", "parallel"),
        vmem_limit_bytes=48 * 1024 * 1024,
    )
    if b is None:
        return pl.pallas_call(
            _linear_nobias_kernel,
            grid=grid,
            in_specs=[x_spec, w_spec],
            out_specs=o_spec,
            out_shape=out_shape,
            compiler_params=cparams,
        )(x2d, w)
    b_spec = pl.BlockSpec((1, tn), lambda i, j: (0, j))
    return pl.pallas_call(
        _linear_bias_kernel,
        grid=grid,
        in_specs=[x_spec, w_spec, b_spec],
        out_specs=o_spec,
        out_shape=out_shape,
        compiler_params=cparams,
    )(x2d, w, b.reshape(1, -1))


# --------------------------- Attention core kernel ---------------------------

def _attn_kernel(heads, d, offs, n_in, return_qk, *refs):
    """One (batch, head-group, q-tile) slice per grid step.

    Block channel layout: the q / k / v refs each hold `heads` adjacent heads of
    width d (grouped mode) or the full fused channel dim (fallback mode), with
    `offs` giving the channel offset of head 0 of q/k/v inside its ref block.
    The D**-0.5 scale is already folded into the q projection weights.
    """
    in_refs = refs[:n_in]
    out_refs = refs[n_in:]
    wv_ref = out_refs[0]
    qk_ref = out_refs[1] if return_qk else None
    if n_in == 3:
        q_ref, k_ref, v_ref = in_refs
    else:  # fallback: one ref carries the whole fused-channel K/V rows
        q_ref, k_ref = in_refs
        v_ref = k_ref
    qo, ko, vo = offs

    qb = q_ref[0]                                   # (TQ, Wq)
    kb = k_ref[0]                                   # (T,  Wk)
    vb = kb if v_ref is k_ref else v_ref[0]         # (T,  Wv)

    for h in range(heads):
        q = qb[:, qo + h * d: qo + (h + 1) * d]     # (TQ, D), pre-scaled
        k = kb[:, ko + h * d: ko + (h + 1) * d]     # (T,  D)
        v = vb[:, vo + h * d: vo + (h + 1) * d]     # (T,  D)
        # NT matmul (contract last dims) -> no XLU transpose for k; f32 MXU acc.
        s = jax.lax.dot_general(
            q, k, (((1,), (1,)), ((), ())), preferred_element_type=jnp.float32
        )                                           # (TQ, T) pre-softmax logits
        if qk_ref is not None:
            qk_ref[0, h] = s.astype(qk_ref.dtype)
        m = jnp.max(s, axis=-1, keepdims=True)
        e = jnp.exp(s - m)                          # f32 softmax numerator
        l = jnp.sum(e, axis=-1, keepdims=True)      # (TQ, 1)
        acc = jnp.dot(e.astype(v.dtype), v, preferred_element_type=jnp.float32)
        # Normalize AFTER the PV matmul ((TQ, D) work), divide on the EUP slot.
        wv_ref[0, :, h * d:(h + 1) * d] = (
            acc * pl.reciprocal(l, approx=True)
        ).astype(wv_ref.dtype)


def _pick_head_group(n_head, d):
    """Smallest head-group size whose channel width is a multiple of 128 lanes."""
    for hg in range(1, n_head + 1):
        if n_head % hg == 0 and (hg * d) % 128 == 0:
            return hg
    return None


# ------------------------------ Module wrapper ------------------------------

def prepare_params(params, n_head, dtype=None):
    """One-time param prep (hoisted out of the forward):
    fuse Wq/Wk/Wv into one (C, 3C) weight, fold D**-0.5 into the q columns/bias,
    and optionally cast everything to `dtype` (e.g. jnp.bfloat16)."""
    c = params["wq"].shape[0]
    d = c // n_head
    scale = float(d) ** (-0.5)
    w_qkv = jnp.concatenate(
        [params["wq"] * scale, params["wk"], params["wv"]], axis=1)
    b_qkv = jnp.concatenate(
        [params["bq"] * scale, jnp.zeros((c,), params["bq"].dtype), params["bv"]])
    prep = {"w_qkv": w_qkv, "b_qkv": b_qkv, "wo": params["wo"], "bo": params["bo"]}
    if dtype is not None:
        prep = jax.tree_util.tree_map(lambda t: t.astype(dtype), prep)
    return prep


def multi_head_attention(x, prep, n_head, *, return_qk=True, tq=256,
                         qk_dtype=jnp.float32):
    """Forward equivalent to MultiHeadAttention(x) with xa=None, mask=None,
    kv_cache=None.  Returns (out, qk): out (B, T, C); qk (B, H, T, T) in
    qk_dtype (None when return_qk=False)."""
    B, T, C = x.shape
    H = n_head
    D = C // H
    dtype = x.dtype

    # Fused QKV projection: single pass over x (key has no bias; zeros folded in).
    qkv = pallas_linear(x.reshape(B * T, C), prep["w_qkv"], prep["b_qkv"])
    qkv = qkv.reshape(B, T, 3 * C)

    tq = min(T, tq)
    nq = pl.cdiv(T, tq)
    hg = _pick_head_group(H, D)

    if hg is not None:
        # Grouped mode: hg adjacent heads per grid step -> 128-lane-dense blocks.
        W = hg * D
        ng = H // hg
        grid = (B, ng, nq)
        in_specs = [
            pl.BlockSpec((1, tq, W), lambda b, g, i: (b, i, g)),            # q
            pl.BlockSpec((1, T, W), lambda b, g, i: (b, 0, ng + g)),        # k
            pl.BlockSpec((1, T, W), lambda b, g, i: (b, 0, 2 * ng + g)),    # v
        ]
        inputs = (qkv, qkv, qkv)
        offs = (0, 0, 0)
        n_in = 3
        heads_per_block = hg
        wv_spec = pl.BlockSpec((1, tq, W), lambda b, g, i: (b, i, g))
        qk_spec = pl.BlockSpec((1, hg, tq, T), lambda b, g, i: (b, g, i, 0))
    else:
        # TODO(synk): head width not groupable to a 128-lane multiple; fall back
        # to reading the full fused channel dim per row tile (lane-sparse heads).
        grid = (B, nq)
        in_specs = [
            pl.BlockSpec((1, tq, 3 * C), lambda b, i: (b, i, 0)),           # q rows
            pl.BlockSpec((1, T, 3 * C), lambda b, i: (b, 0, 0)),            # k/v rows
        ]
        inputs = (qkv, qkv)
        offs = (0, C, 2 * C)
        n_in = 2
        heads_per_block = H
        wv_spec = pl.BlockSpec((1, tq, C), lambda b, i: (b, i, 0))
        qk_spec = pl.BlockSpec((1, H, tq, T), lambda b, i: (b, 0, i, 0))

    kernel = functools.partial(
        _attn_kernel, heads_per_block, D, offs, n_in, return_qk)
    cparams = pltpu.CompilerParams(
        dimension_semantics=("parallel",) * len(grid))

    if return_qk:
        wv, qk = pl.pallas_call(
            kernel,
            grid=grid,
            in_specs=in_specs,
            out_specs=[wv_spec, qk_spec],
            out_shape=(
                jax.ShapeDtypeStruct((B, T, C), dtype),
                jax.ShapeDtypeStruct((B, H, T, T), qk_dtype),
            ),
            compiler_params=cparams,
        )(*inputs)
    else:
        # Flash path: no (T, T) logits written back to HBM.
        wv = pl.pallas_call(
            kernel,
            grid=grid,
            in_specs=in_specs,
            out_specs=wv_spec,
            out_shape=jax.ShapeDtypeStruct((B, T, C), dtype),
            compiler_params=cparams,
        )(*inputs)
        qk = None

    # wv is already (B, T, C): no head merge / transpose needed.
    out = pallas_linear(wv.reshape(B * T, C), prep["wo"], prep["bo"])
    return out.reshape(B, T, C), qk


# ------------------------------ Pure-JAX reference ---------------------------

def reference_mha(x, params, n_head):
    B, T, C = x.shape
    D = C // n_head
    q = x @ params["wq"] + params["bq"]
    k = x @ params["wk"]
    v = x @ params["wv"] + params["bv"]
    scale = float(D) ** (-0.25)
    qh = q.reshape(B, T, n_head, D).transpose(0, 2, 1, 3) * scale
    kh = k.reshape(B, T, n_head, D).transpose(0, 2, 3, 1) * scale
    vh = v.reshape(B, T, n_head, D).transpose(0, 2, 1, 3)
    qk = (qh @ kh).astype(jnp.float32)
    w = jax.nn.softmax(qk, axis=-1).astype(q.dtype)
    wv = (w @ vh).transpose(0, 2, 1, 3).reshape(B, T, C)
    out = wv @ params["wo"] + params["bo"]
    return out, qk


# ---------------------------------- Main ------------------------------------

if __name__ == "__main__":
    # D = 64 so two heads pack into one 128-lane channel block (grouped mode).
    B, T, n_state, n_head = 2, 8, 256, 4

    key = jax.random.PRNGKey(0)
    ks = jax.random.split(key, 8)
    init = lambda k, shape: (0.02 * jax.random.normal(k, shape, jnp.float32))
    params = {
        "wq": init(ks[0], (n_state, n_state)),
        "bq": init(ks[1], (n_state,)),
        "wk": init(ks[2], (n_state, n_state)),
        "wv": init(ks[3], (n_state, n_state)),
        "bv": init(ks[4], (n_state,)),
        "wo": init(ks[5], (n_state, n_state)),
        "bo": init(ks[6], (n_state,)),
    }
    x = jax.random.normal(ks[7], (B, T, n_state), jnp.float32)

    # Param prep hoisted out of the forward (fused QKV weight, scale folded in).
    # For bf16 MXU / halved HBM traffic: prepare_params(..., dtype=jnp.bfloat16)
    # and feed x.astype(jnp.bfloat16).
    prep = prepare_params(params, n_head)

    # Full path (matches the PyTorch module: returns (out, qk logits)).
    out, qk = multi_head_attention(x, prep, n_head, return_qk=True)
    out = jax.block_until_ready(out)
    qk = jax.block_until_ready(qk)

    # Fast path (no qk writeback) — same `out`, qk skipped.
    out_fast, _ = multi_head_attention(x, prep, n_head, return_qk=False)
    out_fast = jax.block_until_ready(out_fast)

    ref_out, ref_qk = reference_mha(x, params, n_head)
    assert out.shape == (B, T, n_state) and out.dtype == jnp.float32
    assert qk.shape == (B, n_head, T, T) and qk.dtype == jnp.float32
    assert jnp.allclose(qk, ref_qk, atol=1e-5, rtol=1e-5)
    # out uses the approximate-EUP reciprocal for softmax normalization.
    assert jnp.allclose(out, ref_out, atol=1e-3, rtol=1e-3)
    assert jnp.allclose(out_fast, ref_out, atol=1e-3, rtol=1e-3)

    print("KERNEL_OK")
</pallas_src>

<mosaic_0001>
module attributes {stable_mosaic.version = 11 : i64} {
  func.func @_linear_bias_kernel(%arg0: i32, %arg1: i32, %arg2: memref<16x256xf32, #tpu.memory_space<vmem>>, %arg3: memref<256x768xf32, #tpu.memory_space<vmem>>, %arg4: memref<1x768xf32, #tpu.memory_space<vmem>>, %arg5: memref<16x768xf32, #tpu.memory_space<vmem>>) attributes {dimension_semantics = [#tpu.dimension_semantics<parallel>, #tpu.dimension_semantics<parallel>], iteration_bounds = array<i64: 1, 1>, scalar_prefetch = 0 : i64, scratch_operands = 0 : i64, tpu.core_type = #tpu.core_type<tc>, window_params = [{transform_indices = @transform_0, window_bounds = array<i64: 16, 256>}, {transform_indices = @transform_1, window_bounds = array<i64: 256, 768>}, {transform_indices = @transform_2, window_bounds = array<i64: 1, 768>}, {transform_indices = @transform_3, window_bounds = array<i64: 16, 768>}]} {
    %c0 = arith.constant 0 : index
    %c0_0 = arith.constant 0 : index
    %0 = vector.load %arg2[%c0, %c0_0] : memref<16x256xf32, #tpu.memory_space<vmem>>, vector<16x256xf32>
    %c0_1 = arith.constant 0 : index
    %c0_2 = arith.constant 0 : index
    %1 = vector.load %arg3[%c0_1, %c0_2] : memref<256x768xf32, #tpu.memory_space<vmem>>, vector<256x768xf32>
    %cst = arith.constant dense<0.000000e+00> : vector<16x768xf32>
    %2 = tpu.matmul %0, %1, %cst {dimension_numbers = #tpu.dot_dimension_numbers<[1], [0], [0], [1], [0, 0, 1, 1], [], []>} : vector<16x256xf32>, vector<256x768xf32>, vector<16x768xf32> -> vector<16x768xf32>
    %c0_3 = arith.constant 0 : index
    %c0_4 = arith.constant 0 : index
    %3 = vector.load %arg4[%c0_3, %c0_4] : memref<1x768xf32, #tpu.memory_space<vmem>>, vector<1x768xf32>
    %4 = vector.broadcast %3 : vector<1x768xf32> to vector<16x768xf32>
    %5 = arith.addf %2, %4 : vector<16x768xf32>
    %c0_5 = arith.constant 0 : index
    %c0_6 = arith.constant 0 : index
    %6 = vector.load %arg5[%c0_5, %c0_6] : memref<16x768xf32, #tpu.memory_space<vmem>>, vector<16x768xf32>
    tpu.vector_store %arg5[%c0_5, %c0_6], %5 {strides = array<i32>} : memref<16x768xf32, #tpu.memory_space<vmem>>, vector<16x768xf32>,
    return
  }
  func.func @transform_0(%arg0: i32, %arg1: i32) -> (i32, i32) {
    %c0_i32 = arith.constant 0 : i32
    %c0_i32_0 = arith.constant 0 : i32
    return %arg0, %c0_i32 : i32, i32
  }
  func.func @transform_1(%arg0: i32, %arg1: i32) -> (i32, i32) {
    %c0_i32 = arith.constant 0 : i32
    %c0_i32_0 = arith.constant 0 : i32
    return %c0_i32, %arg1 : i32, i32
  }
  func.func @transform_2(%arg0: i32, %arg1: i32) -> (i32, i32) {
    %c0_i32 = arith.constant 0 : i32
    %c0_i32_0 = arith.constant 0 : i32
    return %c0_i32, %arg1 : i32, i32
  }
  func.func @transform_3(%arg0: i32, %arg1: i32) -> (i32, i32) {
    %c0_i32 = arith.constant 0 : i32
    return %arg0, %arg1 : i32, i32
  }
}

</mosaic_0001>

<llo_original>
// kernel: tpu_custom_call.1
$region0: #{tpu_custom_call.1}
  #allocation0 [shape = 'u32[]', space=smem, size = 0x4, offset = 0x4, fixed_abs, tag = 'smem constant byte address 0x4 - core index']
  #allocation1 [shape = 'u32[144,128]{1,0:T(1,128)}', space=vmem, size = 0x12000, scoped, tag = 'internal scratch']
  %s0 = inlined_call_operand.hbm [shape: f32[16,256], index: 0, kind: input, shape index: {}]
  %s1 = inlined_call_operand.hbm [shape: f32[256,768], index: 1, kind: input, shape index: {}]
  %s2 = inlined_call_operand.hbm [shape: f32[1,768], index: 2, kind: input, shape index: {}]
  %s3 = inlined_call_operand.hbm [shape: f32[16,768], index: 3, kind: output, shape index: {}]
  %s4 = sld [smem:[#allocation0]]
  $region34: #{tpu_custom_call.1} parent=0
    _
  %s6 = ssub.s32 1, %s4
  %s7 = scalar_select 0, %s6, %s4
  $region1: #{tpu_custom_call.1} parent=0
    #allocation2 [shape = 'u8[16384]{0}', space=vmem, size = 0x4000, scoped, tag = 'input window, operand 0, single buffered']
    #allocation3 [shape = 's32[1]{0}', space=sflag, size = 0x4, scoped, tag = 'scoped memory for tpu_custom_call.1']
    #allocation4 [shape = 's32[1]{0}', space=sflag, size = 0x4, scoped, tag = 'scoped memory for tpu_custom_call.1']
    #allocation5 [shape = 'u8[786432]{0}', space=vmem, size = 0xc0000, scoped, tag = 'input window, operand 1, single buffered']
    #allocation6 [shape = 's32[1]{0}', space=sflag, size = 0x4, scoped, tag = 'scoped memory for tpu_custom_call.1']
    #allocation7 [shape = 'u8[3072]{0}', space=vmem, size = 0xc00, scoped, tag = 'input window, operand 2, single buffered']
    #allocation8 [shape = 'u8[49152]{0}', space=vmem, size = 0xc000, scoped, tag = 'output window, operand 0, single buffered']
    %8 = vsyncpa [#allocation3], 0
    %9 = vsyncpa [#allocation6], 0
    %10 = vsyncpa [#allocation4], 0
    // Predicated region
    $region2: #{tpu_custom_call.1} parent=1 // pred_check
      _
    $region3: #{tpu_custom_call.1} parent=1 // pred_check_branch
      %12 = sbr.rel (0) target = $region5
    $region4: #{tpu_custom_call.1} parent=1 // pred_region
      %s14 = ssub.s32 512, 512
      %15 = vsyncadd [#allocation3], %s14
      %s16 = sshll.u32 [#allocation2], 4
      %s17 = int_to_ptr.vmem [resolvable:$true] %s16
      %22 = dma.hbm_to_vmem [thread:$0]  %s0, 512, %s17, [#allocation3], 256, 256, 16
    $region5: #{tpu_custom_call.1} parent=1 // pred_fallthru
      _
    // Predicated region
    $region6: #{tpu_custom_call.1} parent=1 // pred_check
      _
    $region7: #{tpu_custom_call.1} parent=1 // pred_check_branch
      %24 = sbr.rel (0) target = $region9
    $region8: #{tpu_custom_call.1} parent=1 // pred_region
      %s26 = ssub.s32 24576, 24576
      %27 = vsyncadd [#allocation6], %s26
      %s28 = sshll.u32 [#allocation5], 4
      %s29 = int_to_ptr.vmem [resolvable:$true] %s28
      %34 = dma.hbm_to_vmem [thread:$0]  %s1, 24576, %s29, [#allocation6], 768, 768, 48
    $region9: #{tpu_custom_call.1} parent=1 // pred_fallthru
      _
    // Predicated region
    $region10: #{tpu_custom_call.1} parent=1 // pred_check
      _
    $region11: #{tpu_custom_call.1} parent=1 // pred_check_branch
      %36 = sbr.rel (0) target = $region13
    $region12: #{tpu_custom_call.1} parent=1 // pred_region
      %s38 = ssub.s32 96, 96
      %39 = vsyncadd [#allocation6], %s38
      %s41 = sshll.u32 [#allocation7], 4
      %s42 = int_to_ptr.vmem [resolvable:$true] %s41
      %44 = dma.hbm_to_vmem [thread:$0]  %s2, 96, %s42, [#allocation6]
    $region13: #{tpu_custom_call.1} parent=1 // pred_fallthru
      _
    // Predicated region
    $region14: #{tpu_custom_call.1} parent=1 // pred_check
      _
    $region15: #{tpu_custom_call.1} parent=1 // pred_check_branch
      %46 = sbr.rel (0) target = $region17
    $region16: #{tpu_custom_call.1} parent=1 // pred_region
      %47 = dma.done [#allocation3], 512
    $region17: #{tpu_custom_call.1} parent=1 // pred_fallthru
      _
    // Predicated region
    $region18: #{tpu_custom_call.1} parent=1 // pred_check
      _
    $region19: #{tpu_custom_call.1} parent=1 // pred_check_branch
      %49 = sbr.rel (0) target = $region21
    $region20: #{tpu_custom_call.1} parent=1 // pred_region
      %50 = dma.done [#allocation6], 24576
    $region21: #{tpu_custom_call.1} parent=1 // pred_fallthru
      _
    // Predicated region
    $region22: #{tpu_custom_call.1} parent=1 // pred_check
      _
    $region23: #{tpu_custom_call.1} parent=1 // pred_check_branch
      %52 = sbr.rel (0) target = $region25
    $region24: #{tpu_custom_call.1} parent=1 // pred_region
      %53 = dma.done [#allocation6], 96
    $region25: #{tpu_custom_call.1} parent=1 // pred_fallthru
      _
    %v54 = vld [vmem:[#allocation2] sm:$0xff]
    %v55 = vld [vmem:[#allocation2 + $0x8] sm:$0xff]
    %v56 = vld [vmem:[#allocation2 + $0x10] sm:$0xff]
    %v57 = vld [vmem:[#allocation2 + $0x18] sm:$0xff]
    %v58 = vld [vmem:[#allocation5] sm:$0xff]
    %v59 = vld [vmem:[#allocation5 + $0x8] sm:$0xff]
    %v60 = vld [vmem:[#allocation5 + $0x10] sm:$0xff]
    %v61 = vld [vmem:[#allocation5 + $0x18] sm:$0xff]
    %v62 = vld [vmem:[#allocation5 + $0x20] sm:$0xff]
    %v63 = vld [vmem:[#allocation5 + $0x28] sm:$0xff]
    %v64 = vld [vmem:[#allocation5 + $0x30] sm:$0xff]
    %v65 = vld [vmem:[#allocation5 + $0x38] sm:$0xff]
    %v66 = vld [vmem:[#allocation5 + $0x40] sm:$0xff]
    %v67 = vld [vmem:[#allocation5 + $0x48] sm:$0xff]
    %v68 = vld [vmem:[#allocation5 + $0x50] sm:$0xff]
    %v69 = vld [vmem:[#allocation5 + $0x58] sm:$0xff]
    %v70 = vld [vmem:[#allocation5 + $0x60] sm:$0xff]
    %v71 = vld [vmem:[#allocation5 + $0x68] sm:$0xff]
    %v72 = vld [vmem:[#allocation5 + $0x70] sm:$0xff]
    %v73 = vld [vmem:[#allocation5 + $0x78] sm:$0xff]
    %v74 = vld [vmem:[#allocation5 + $0x80] sm:$0xff]
    %v75 = vld [vmem:[#allocation5 + $0x88] sm:$0xff]
    %v76 = vld [vmem:[#allocation5 + $0x90] sm:$0xff]
    %v77 = vld [vmem:[#allocation5 + $0x98] sm:$0xff]
    %v78 = vld [vmem:[#allocation5 + $0xa0] sm:$0xff]
    %v79 = vld [vmem:[#allocation5 + $0xa8] sm:$0xff]
    %v80 = vld [vmem:[#allocation5 + $0xb0] sm:$0xff]
    %v81 = vld [vmem:[#allocation5 + $0xb8] sm:$0xff]
    %v82 = vld [vmem:[#allocation5 + $0xc0] sm:$0xff]
    %v83 = vld [vmem:[#allocation5 + $0xc8] sm:$0xff]
    %v84 = vld [vmem:[#allocation5 + $0xd0] sm:$0xff]
    %v85 = vld [vmem:[#allocation5 + $0xd8] sm:$0xff]
    %v86 = vld [vmem:[#allocation5 + $0xe0] sm:$0xff]
    %v87 = vld [vmem:[#allocation5 + $0xe8] sm:$0xff]
    %v88 = vld [vmem:[#allocation5 + $0xf0] sm:$0xff]
    %v89 = vld [vmem:[#allocation5 + $0xf8] sm:$0xff]
    %v90 = vld [vmem:[#allocation5 + $0x100] sm:$0xff]
    %v91 = vld [vmem:[#allocation5 + $0x108] sm:$0xff]
    %v92 = vld [vmem:[#allocation5 + $0x110] sm:$0xff]
    %v93 = vld [vmem:[#allocation5 + $0x118] sm:$0xff]
    %v94 = vld [vmem:[#allocation5 + $0x120] sm:$0xff]
    %v95 = vld [vmem:[#allocation5 + $0x128] sm:$0xff]
    %v96 = vld [vmem:[#allocation5 + $0x130] sm:$0xff]
    %v97 = vld [vmem:[#allocation5 + $0x138] sm:$0xff]
    %v98 = vld [vmem:[#allocation5 + $0x140] sm:$0xff]
    %v99 = vld [vmem:[#allocation5 + $0x148] sm:$0xff]
    %v100 = vld [vmem:[#allocation5 + $0x150] sm:$0xff]
    %v101 = vld [vmem:[#allocation5 + $0x158] sm:$0xff]
    %v102 = vld [vmem:[#allocation5 + $0x160] sm:$0xff]
    %v103 = vld [vmem:[#allocation5 + $0x168] sm:$0xff]
    %v104 = vld [vmem:[#allocation5 + $0x170] sm:$0xff]
    %v105 = vld [vmem:[#allocation5 + $0x178] sm:$0xff]
    %v106 = vld [vmem:[#allocation5 + $0x180] sm:$0xff]
    %v107 = vld [vmem:[#allocation5 + $0x188] sm:$0xff]
    %v108 = vld [vmem:[#allocation5 + $0x190] sm:$0xff]
    %v109 = vld [vmem:[#allocation5 + $0x198] sm:$0xff]
    %v110 = vld [vmem:[#allocation5 + $0x1a0] sm:$0xff]
    %v111 = vld [vmem:[#allocation5 + $0x1a8] sm:$0xff]
    %v112 = vld [vmem:[#allocation5 + $0x1b0] sm:$0xff]
    %v113 = vld [vmem:[#allocation5 + $0x1b8] sm:$0xff]
    %v114 = vld [vmem:[#allocation5 + $0x1c0] sm:$0xff]
    %v115 = vld [vmem:[#allocation5 + $0x1c8] sm:$0xff]
    %v116 = vld [vmem:[#allocation5 + $0x1d0] sm:$0xff]
    %v117 = vld [vmem:[#allocation5 + $0x1d8] sm:$0xff]
    %v118 = vld [vmem:[#allocation5 + $0x1e0] sm:$0xff]
    %v119 = vld [vmem:[#allocation5 + $0x1e8] sm:$0xff]
    %v120 = vld [vmem:[#allocation5 + $0x1f0] sm:$0xff]
    %v121 = vld [vmem:[#allocation5 + $0x1f8] sm:$0xff]
    %v122 = vld [vmem:[#allocation5 + $0x200] sm:$0xff]
    %v123 = vld [vmem:[#allocation5 + $0x208] sm:$0xff]
    %v124 = vld [vmem:[#allocation5 + $0x210] sm:$0xff]
    %v125 = vld [vmem:[#allocation5 + $0x218] sm:$0xff]
    %v126 = vld [vmem:[#allocation5 + $0x220] sm:$0xff]
    %v127 = vld [vmem:[#allocation5 + $0x228] sm:$0xff]
    %v128 = vld [vmem:[#allocation5 + $0x230] sm:$0xff]
    %v129 = vld [vmem:[#allocation5 + $0x238] sm:$0xff]
    %v130 = vld [vmem:[#allocation5 + $0x240] sm:$0xff]
    %v131 = vld [vmem:[#allocation5 + $0x248] sm:$0xff]
    %v132 = vld [vmem:[#allocation5 + $0x250] sm:$0xff]
    %v133 = vld [vmem:[#allocation5 + $0x258] sm:$0xff]
    %v134 = vld [vmem:[#allocation5 + $0x260] sm:$0xff]
    %v135 = vld [vmem:[#allocation5 + $0x268] sm:$0xff]
    %v136 = vld [vmem:[#allocation5 + $0x270] sm:$0xff]
    %v137 = vld [vmem:[#allocation5 + $0x278] sm:$0xff]
    %v138 = vld [vmem:[#allocation5 + $0x280] sm:$0xff]
    %v139 = vld [vmem:[#allocation5 + $0x288] sm:$0xff]
    %v140 = vld [vmem:[#allocation5 + $0x290] sm:$0xff]
    %v141 = vld [vmem:[#allocation5 + $0x298] sm:$0xff]
    %v142 = vld [vmem:[#allocation5 + $0x2a0] sm:$0xff]
    %v143 = vld [vmem:[#allocation5 + $0x2a8] sm:$0xff]
    %v144 = vld [vmem:[#allocation5 + $0x2b0] sm:$0xff]
    %v145 = vld [vmem:[#allocation5 + $0x2b8] sm:$0xff]
    %v146 = vld [vmem:[#allocation5 + $0x2c0] sm:$0xff]
    %v147 = vld [vmem:[#allocation5 + $0x2c8] sm:$0xff]
    %v148 = vld [vmem:[#allocation5 + $0x2d0] sm:$0xff]
    %v149 = vld [vmem:[#allocation5 + $0x2d8] sm:$0xff]
    %v150 = vld [vmem:[#allocation5 + $0x2e0] sm:$0xff]
    %v151 = vld [vmem:[#allocation5 + $0x2e8] sm:$0xff]
    %v152 = vld [vmem:[#allocation5 + $0x2f0] sm:$0xff]
    %v153 = vld [vmem:[#allocation5 + $0x2f8] sm:$0xff]
    %v154 = vld [vmem:[#allocation5 + $0x300] sm:$0xff]
    %v155 = vld [vmem:[#allocation5 + $0x308] sm:$0xff]
    %v156 = vld [vmem:[#allocation5 + $0x310] sm:$0xff]
    %v157 = vld [vmem:[#allocation5 + $0x318] sm:$0xff]
    %v158 = vld [vmem:[#allocation5 + $0x320] sm:$0xff]
    %v159 = vld [vmem:[#allocation5 + $0x328] sm:$0xff]
    %v160 = vld [vmem:[#allocation5 + $0x330] sm:$0xff]
    %v161 = vld [vmem:[#allocation5 + $0x338] sm:$0xff]
    %v162 = vld [vmem:[#allocation5 + $0x340] sm:$0xff]
    %v163 = vld [vmem:[#allocation5 + $0x348] sm:$0xff]
    %v164 = vld [vmem:[#allocation5 + $0x350] sm:$0xff]
    %v165 = vld [vmem:[#allocation5 + $0x358] sm:$0xff]
    %v166 = vld [vmem:[#allocation5 + $0x360] sm:$0xff]
    %v167 = vld [vmem:[#allocation5 + $0x368] sm:$0xff]
    %v168 = vld [vmem:[#allocation5 + $0x370] sm:$0xff]
    %v169 = vld [vmem:[#allocation5 + $0x378] sm:$0xff]
    %v170 = vld [vmem:[#allocation5 + $0x380] sm:$0xff]
    %v171 = vld [vmem:[#allocation5 + $0x388] sm:$0xff]
    %v172 = vld [vmem:[#allocation5 + $0x390] sm:$0xff]
    %v173 = vld [vmem:[#allocation5 + $0x398] sm:$0xff]
    %v174 = vld [vmem:[#allocation5 + $0x3a0] sm:$0xff]
    %v175 = vld [vmem:[#allocation5 + $0x3a8] sm:$0xff]
    %v176 = vld [vmem:[#allocation5 + $0x3b0] sm:$0xff]
    %v177 = vld [vmem:[#allocation5 + $0x3b8] sm:$0xff]
    %v178 = vld [vmem:[#allocation5 + $0x3c0] sm:$0xff]
    %v179 = vld [vmem:[#allocation5 + $0x3c8] sm:$0xff]
    %v180 = vld [vmem:[#allocation5 + $0x3d0] sm:$0xff]
    %v181 = vld [vmem:[#allocation5 + $0x3d8] sm:$0xff]
    %v182 = vld [vmem:[#allocation5 + $0x3e0] sm:$0xff]
    %v183 = vld [vmem:[#allocation5 + $0x3e8] sm:$0xff]
    %v184 = vld [vmem:[#allocation5 + $0x3f0] sm:$0xff]
    %v185 = vld [vmem:[#allocation5 + $0x3f8] sm:$0xff]
    %v186 = vld [vmem:[#allocation5 + $0x400] sm:$0xff]
    %v187 = vld [vmem:[#allocation5 + $0x408] sm:$0xff]
    %v188 = vld [vmem:[#allocation5 + $0x410] sm:$0xff]
    %v189 = vld [vmem:[#allocation5 + $0x418] sm:$0xff]
    %v190 = vld [vmem:[#allocation5 + $0x420] sm:$0xff]
    %v191 = vld [vmem:[#allocation5 + $0x428] sm:$0xff]
    %v192 = vld [vmem:[#allocation5 + $0x430] sm:$0xff]
    %v193 = vld [vmem:[#allocation5 + $0x438] sm:$0xff]
    %v194 = vld [vmem:[#allocation5 + $0x440] sm:$0xff]
    %v195 = vld [vmem:[#allocation5 + $0x448] sm:$0xff]
    %v196 = vld [vmem:[#allocation5 + $0x450] sm:$0xff]
    %v197 = vld [vmem:[#allocation5 + $0x458] sm:$0xff]
    %v198 = vld [vmem:[#allocation5 + $0x460] sm:$0xff]
    %v199 = vld [vmem:[#allocation5 + $0x468] sm:$0xff]
    %v200 = vld [vmem:[#allocation5 + $0x470] sm:$0xff]
    %v201 = vld [vmem:[#allocation5 + $0x478] sm:$0xff]
    %v202 = vld [vmem:[#allocation5 + $0x480] sm:$0xff]
    %v203 = vld [vmem:[#allocation5 + $0x488] sm:$0xff]
    %v204 = vld [vmem:[#allocation5 + $0x490] sm:$0xff]
    %v205 = vld [vmem:[#allocation5 + $0x498] sm:$0xff]
    %v206 = vld [vmem:[#allocation5 + $0x4a0] sm:$0xff]
    %v207 = vld [vmem:[#allocation5 + $0x4a8] sm:$0xff]
    %v208 = vld [vmem:[#allocation5 + $0x4b0] sm:$0xff]
    %v209 = vld [vmem:[#allocation5 + $0x4b8] sm:$0xff]
    %v210 = vld [vmem:[#allocation5 + $0x4c0] sm:$0xff]
    %v211 = vld [vmem:[#allocation5 + $0x4c8] sm:$0xff]
    %v212 = vld [vmem:[#allocation5 + $0x4d0] sm:$0xff]
    %v213 = vld [vmem:[#allocation5 + $0x4d8] sm:$0xff]
    %v214 = vld [vmem:[#allocation5 + $0x4e0] sm:$0xff]
    %v215 = vld [vmem:[#allocation5 + $0x4e8] sm:$0xff]
    %v216 = vld [vmem:[#allocation5 + $0x4f0] sm:$0xff]
    %v217 = vld [vmem:[#allocation5 + $0x4f8] sm:$0xff]
    %v218 = vld [vmem:[#allocation5 + $0x500] sm:$0xff]
    %v219 = vld [vmem:[#allocation5 + $0x508] sm:$0xff]
    %v220 = vld [vmem:[#allocation5 + $0x510] sm:$0xff]
    %v221 = vld [vmem:[#allocation5 + $0x518] sm:$0xff]
    %v222 = vld [vmem:[#allocation5 + $0x520] sm:$0xff]
    %v223 = vld [vmem:[#allocation5 + $0x528] sm:$0xff]
    %v224 = vld [vmem:[#allocation5 + $0x530] sm:$0xff]
    %v225 = vld [vmem:[#allocation5 + $0x538] sm:$0xff]
    %v226 = vld [vmem:[#allocation5 + $0x540] sm:$0xff]
    %v227 = vld [vmem:[#allocation5 + $0x548] sm:$0xff]
    %v228 = vld [vmem:[#allocation5 + $0x550] sm:$0xff]
    %v229 = vld [vmem:[#allocation5 + $0x558] sm:$0xff]
    %v230 = vld [vmem:[#allocation5 + $0x560] sm:$0xff]
    %v231 = vld [vmem:[#allocation5 + $0x568] sm:$0xff]
    %v232 = vld [vmem:[#allocation5 + $0x570] sm:$0xff]
    %v233 = vld [vmem:[#allocation5 + $0x578] sm:$0xff]
    %v234 = vld [vmem:[#allocation5 + $0x580] sm:$0xff]
    %v235 = vld [vmem:[#allocation5 + $0x588] sm:$0xff]
    %v236 = vld [vmem:[#allocation5 + $0x590] sm:$0xff]
    %v237 = vld [vmem:[#allocation5 + $0x598] sm:$0xff]
    %v238 = vld [vmem:[#allocation5 + $0x5a0] sm:$0xff]
    %v239 = vld [vmem:[#allocation5 + $0x5a8] sm:$0xff]
    %v240 = vld [vmem:[#allocation5 + $0x5b0] sm:$0xff]
    %v241 = vld [vmem:[#allocation5 + $0x5b8] sm:$0xff]
    %v242 = vld [vmem:[#allocation5 + $0x5c0] sm:$0xff]
    %v243 = vld [vmem:[#allocation5 + $0x5c8] sm:$0xff]
    %v244 = vld [vmem:[#allocation5 + $0x5d0] sm:$0xff]
    %v245 = vld [vmem:[#allocation5 + $0x5d8] sm:$0xff]
    %v246 = vld [vmem:[#allocation5 + $0x5e0] sm:$0xff]
    %v247 = vld [vmem:[#allocation5 + $0x5e8] sm:$0xff]
    %v248 = vld [vmem:[#allocation5 + $0x5f0] sm:$0xff]
    %v249 = vld [vmem:[#allocation5 + $0x5f8] sm:$0xff]
    %v250 = vld [vmem:[#allocation7] sm:$0x3f]
    %v252 = vlaneseq
    %v253 = vshrl.u32 %v252, 7
    %v254 = vsub.s32 0, %v253
    %v255 = vrot.slane %v250, %v254
    %v256 = vlaneseq
    %v257 = vshrl.u32 %v256, 7
    %v258 = vsub.s32 1, %v257
    %v259 = vrot.slane %v250, %v258
    %v260 = vlaneseq
    %v261 = vshrl.u32 %v260, 7
    %v262 = vsub.s32 2, %v261
    %v263 = vrot.slane %v250, %v262
    %v264 = vlaneseq
    %v265 = vshrl.u32 %v264, 7
    %v266 = vsub.s32 3, %v265
    %v267 = vrot.slane %v250, %v266
    %v268 = vlaneseq
    %v269 = vshrl.u32 %v268, 7
    %v270 = vsub.s32 4, %v269
    %v271 = vrot.slane %v250, %v270
    %v272 = vlaneseq
    %v273 = vshrl.u32 %v272, 7
    %v274 = vsub.s32 5, %v273
    %v275 = vrot.slane %v250, %v274
    %282 = vmatprep.subr.mxu0 %v149
    %283 = vmatpush1.msra.mxu0 %v148
    %284 = vmatprep.subr.mxu0 %v143
    %285 = vmatpush1.msra.mxu0 %v142
    %286 = vmatprep.subr.mxu0 %v137
    %287 = vmatpush1.msra.mxu0 %v136
    %288 = vmatprep.subr.mxu0 %v131
    %289 = vmatpush1.msra.mxu0 %v130
    %290 = vmatprep.subr.mxu0 %v125
    %291 = vmatpush1.msra.mxu0 %v124
    %292 = vmatprep.subr.mxu0 %v119
    %293 = vmatpush1.msra.mxu0 %v118
    %294 = vmatprep.subr.mxu0 %v113
    %295 = vmatpush1.msra.mxu0 %v112
    %296 = vmatprep.subr.mxu0 %v107
    %297 = vmatpush1.msra.mxu0 %v106
    %298 = vmatprep.subr.mxu0 %v101
    %299 = vmatpush1.msra.mxu0 %v100
    %300 = vmatprep.subr.mxu0 %v95
    %301 = vmatpush1.msra.mxu0 %v94
    %302 = vmatprep.subr.mxu0 %v89
    %303 = vmatpush1.msra.mxu0 %v88
    %304 = vmatprep.subr.mxu0 %v83
    %305 = vmatpush1.msra.mxu0 %v82
    %306 = vmatprep.subr.mxu0 %v77
    %307 = vmatpush1.msra.mxu0 %v76
    %308 = vmatprep.subr.mxu0 %v71
    %309 = vmatpush1.msra.mxu0 %v70
    %310 = vmatprep.subr.mxu0 %v65
    %311 = vmatpush1.msra.mxu0 %v64
    %312 = vmatprep.subr.mxu0 %v59
    %313 = vmatpush1.msra.mxu0 %v58
    %314 = vmatprep.subr.mxu0 %v245
    %315 = vmatpush2.msra.mxu0 %v244
    %316 = vmatprep.subr.mxu0 %v239
    %317 = vmatpush2.msra.mxu0 %v238
    %318 = vmatprep.subr.mxu0 %v233
    %319 = vmatpush2.msra.mxu0 %v232
    %320 = vmatprep.subr.mxu0 %v227
    %321 = vmatpush2.msra.mxu0 %v226
    %322 = vmatprep.subr.mxu0 %v221
    %323 = vmatpush2.msra.mxu0 %v220
    %324 = vmatprep.subr.mxu0 %v215
    %325 = vmatpush2.msra.mxu0 %v214
    %326 = vmatprep.subr.mxu0 %v209
    %327 = vmatpush2.msra.mxu0 %v208
    %328 = vmatprep.subr.mxu0 %v203
    %329 = vmatpush2.msra.mxu0 %v202
    %330 = vmatprep.subr.mxu0 %v197
    %331 = vmatpush2.msra.mxu0 %v196
    %332 = vmatprep.subr.mxu0 %v191
    %333 = vmatpush2.msra.mxu0 %v190
    %334 = vmatprep.subr.mxu0 %v185
    %335 = vmatpush2.msra.mxu0 %v184
    %336 = vmatprep.subr.mxu0 %v179
    %337 = vmatpush2.msra.mxu0 %v178
    %338 = vmatprep.subr.mxu0 %v173
    %339 = vmatpush2.msra.mxu0 %v172
    %340 = vmatprep.subr.mxu0 %v167
    %341 = vmatpush2.msra.mxu0 %v166
    %342 = vmatprep.subr.mxu0 %v161
    %343 = vmatpush2.msra.mxu0 %v160
    %344 = vmatprep.subr.mxu0 %v155
    %345 = vmatpush2.msra.mxu0 %v154
    %346 = vmatprep.mubr.f32.mxu0 %v55
    %347 = vmatmul.mubr.f32.gmra.mxu0 %v54
    %v348 = vpop.f32.mrf.mxu0
    %v349 = vadd.f32 %v255, %v348
    %v350 = vpop.f32.mrf.mxu0
    %v351 = vadd.f32 %v259, %v350
    %352 = vmatprep.mubr.f32.mxu0 %v57
    %353 = vmatmul.mubr.f32.gmra.mxu0 %v56
    %v354 = vpop.f32.mrf.mxu0
    %v355 = vadd.f32 %v255, %v354
    %v356 = vpop.f32.mrf.mxu0
    %v357 = vadd.f32 %v259, %v356
    %358 = vdwg.mxu0
    %359 = vmatprep.subr.mxu0 %v151
    %360 = vmatpush1.msra.mxu0 %v150
    %361 = vmatprep.subr.mxu0 %v145
    %362 = vmatpush1.msra.mxu0 %v144
    %363 = vmatprep.subr.mxu0 %v139
    %364 = vmatpush1.msra.mxu0 %v138
    %365 = vmatprep.subr.mxu0 %v133
    %366 = vmatpush1.msra.mxu0 %v132
    %367 = vmatprep.subr.mxu0 %v127
    %368 = vmatpush1.msra.mxu0 %v126
    %369 = vmatprep.subr.mxu0 %v121
    %370 = vmatpush1.msra.mxu0 %v120
    %371 = vmatprep.subr.mxu0 %v115
    %372 = vmatpush1.msra.mxu0 %v114
    %373 = vmatprep.subr.mxu0 %v109
    %374 = vmatpush1.msra.mxu0 %v108
    %375 = vmatprep.subr.mxu0 %v103
    %376 = vmatpush1.msra.mxu0 %v102
    %377 = vmatprep.subr.mxu0 %v97
    %378 = vmatpush1.msra.mxu0 %v96
    %379 = vmatprep.subr.mxu0 %v91
    %380 = vmatpush1.msra.mxu0 %v90
    %381 = vmatprep.subr.mxu0 %v85
    %382 = vmatpush1.msra.mxu0 %v84
    %383 = vmatprep.subr.mxu0 %v79
    %384 = vmatpush1.msra.mxu0 %v78
    %385 = vmatprep.subr.mxu0 %v73
    %386 = vmatpush1.msra.mxu0 %v72
    %387 = vmatprep.subr.mxu0 %v67
    %388 = vmatpush1.msra.mxu0 %v66
    %389 = vmatprep.subr.mxu0 %v61
    %390 = vmatpush1.msra.mxu0 %v60
    %391 = vmatprep.subr.mxu0 %v247
    %392 = vmatpush2.msra.mxu0 %v246
    %393 = vmatprep.subr.mxu0 %v241
    %394 = vmatpush2.msra.mxu0 %v240
    %395 = vmatprep.subr.mxu0 %v235
    %396 = vmatpush2.msra.mxu0 %v234
    %397 = vmatprep.subr.mxu0 %v229
    %398 = vmatpush2.msra.mxu0 %v228
    %399 = vmatprep.subr.mxu0 %v223
    %400 = vmatpush2.msra.mxu0 %v222
    %401 = vmatprep.subr.mxu0 %v217
    %402 = vmatpush2.msra.mxu0 %v216
    %403 = vmatprep.subr.mxu0 %v211
    %404 = vmatpush2.msra.mxu0 %v210
    %405 = vmatprep.subr.mxu0 %v205
    %406 = vmatpush2.msra.mxu0 %v204
    %407 = vmatprep.subr.mxu0 %v199
    %408 = vmatpush2.msra.mxu0 %v198
    %409 = vmatprep.subr.mxu0 %v193
    %410 = vmatpush2.msra.mxu0 %v192
    %411 = vmatprep.subr.mxu0 %v187
    %412 = vmatpush2.msra.mxu0 %v186
    %413 = vmatprep.subr.mxu0 %v181
    %414 = vmatpush2.msra.mxu0 %v180
    %415 = vmatprep.subr.mxu0 %v175
    %416 = vmatpush2.msra.mxu0 %v174
    %417 = vmatprep.subr.mxu0 %v169
    %418 = vmatpush2.msra.mxu0 %v168
    %419 = vmatprep.subr.mxu0 %v163
    %420 = vmatpush2.msra.mxu0 %v162
    %421 = vmatprep.subr.mxu0 %v157
    %422 = vmatpush2.msra.mxu0 %v156
    %423 = vmatprep.mubr.f32.mxu0 %v55
    %424 = vmatmul.mubr.f32.gmra.mxu0 %v54
    %v425 = vpop.f32.mrf.mxu0
    %v426 = vadd.f32 %v263, %v425
    %v427 = vpop.f32.mrf.mxu0
    %v428 = vadd.f32 %v267, %v427
    %429 = vmatprep.mubr.f32.mxu0 %v57
    %430 = vmatmul.mubr.f32.gmra.mxu0 %v56
    %v431 = vpop.f32.mrf.mxu0
    %v432 = vadd.f32 %v263, %v431
    %v433 = vpop.f32.mrf.mxu0
    %v434 = vadd.f32 %v267, %v433
    %435 = vdwg.mxu0
    %436 = vmatprep.subr.mxu0 %v153
    %437 = vmatpush1.msra.mxu0 %v152
    %438 = vmatprep.subr.mxu0 %v147
    %439 = vmatpush1.msra.mxu0 %v146
    %440 = vmatprep.subr.mxu0 %v141
    %441 = vmatpush1.msra.mxu0 %v140
    %442 = vmatprep.subr.mxu0 %v135
    %443 = vmatpush1.msra.mxu0 %v134
    %444 = vmatprep.subr.mxu0 %v129
    %445 = vmatpush1.msra.mxu0 %v128
    %446 = vmatprep.subr.mxu0 %v123
    %447 = vmatpush1.msra.mxu0 %v122
    %448 = vmatprep.subr.mxu0 %v117
    %449 = vmatpush1.msra.mxu0 %v116
    %450 = vmatprep.subr.mxu0 %v111
    %451 = vmatpush1.msra.mxu0 %v110
    %452 = vmatprep.subr.mxu0 %v105
    %453 = vmatpush1.msra.mxu0 %v104
    %454 = vmatprep.subr.mxu0 %v99
    %455 = vmatpush1.msra.mxu0 %v98
    %456 = vmatprep.subr.mxu0 %v93
    %457 = vmatpush1.msra.mxu0 %v92
    %458 = vmatprep.subr.mxu0 %v87
    %459 = vmatpush1.msra.mxu0 %v86
    %460 = vmatprep.subr.mxu0 %v81
    %461 = vmatpush1.msra.mxu0 %v80
    %462 = vmatprep.subr.mxu0 %v75
    %463 = vmatpush1.msra.mxu0 %v74
    %464 = vmatprep.subr.mxu0 %v69
    %465 = vmatpush1.msra.mxu0 %v68
    %466 = vmatprep.subr.mxu0 %v63
    %467 = vmatpush1.msra.mxu0 %v62
    %468 = vmatprep.subr.mxu0 %v249
    %469 = vmatpush2.msra.mxu0 %v248
    %470 = vmatprep.subr.mxu0 %v243
    %471 = vmatpush2.msra.mxu0 %v242
    %472 = vmatprep.subr.mxu0 %v237
    %473 = vmatpush2.msra.mxu0 %v236
    %474 = vmatprep.subr.mxu0 %v231
    %475 = vmatpush2.msra.mxu0 %v230
    %476 = vmatprep.subr.mxu0 %v225
    %477 = vmatpush2.msra.mxu0 %v224
    %478 = vmatprep.subr.mxu0 %v219
    %479 = vmatpush2.msra.mxu0 %v218
    %480 = vmatprep.subr.mxu0 %v213
    %481 = vmatpush2.msra.mxu0 %v212
    %482 = vmatprep.subr.mxu0 %v207
    %483 = vmatpush2.msra.mxu0 %v206
    %484 = vmatprep.subr.mxu0 %v201
    %485 = vmatpush2.msra.mxu0 %v200
    %486 = vmatprep.subr.mxu0 %v195
    %487 = vmatpush2.msra.mxu0 %v194
    %488 = vmatprep.subr.mxu0 %v189
    %489 = vmatpush2.msra.mxu0 %v188
    %490 = vmatprep.subr.mxu0 %v183
    %491 = vmatpush2.msra.mxu0 %v182
    %492 = vmatprep.subr.mxu0 %v177
    %493 = vmatpush2.msra.mxu0 %v176
    %494 = vmatprep.subr.mxu0 %v171
    %495 = vmatpush2.msra.mxu0 %v170
    %496 = vmatprep.subr.mxu0 %v165
    %497 = vmatpush2.msra.mxu0 %v164
    %498 = vmatprep.subr.mxu0 %v159
    %499 = vmatpush2.msra.mxu0 %v158
    %500 = vmatprep.mubr.f32.mxu0 %v55
    %501 = vmatmul.mubr.f32.gmra.mxu0 %v54
    %v502 = vpop.f32.mrf.mxu0
    %v503 = vadd.f32 %v271, %v502
    %v504 = vpop.f32.mrf.mxu0
    %v505 = vadd.f32 %v275, %v504
    %506 = vmatprep.mubr.f32.mxu0 %v57
    %507 = vmatmul.mubr.f32.gmra.mxu0 %v56
    %v508 = vpop.f32.mrf.mxu0
    %v509 = vadd.f32 %v271, %v508
    %v510 = vpop.f32.mrf.mxu0
    %v511 = vadd.f32 %v275, %v510
    %512 = vdwg.mxu0
    %513 = vst [vmem:[#allocation8] sm:$0xff] %v349
    %514 = vst [vmem:[#allocation8 + $0x8] sm:$0xff] %v351
    %515 = vst [vmem:[#allocation8 + $0x10] sm:$0xff] %v426
    %516 = vst [vmem:[#allocation8 + $0x18] sm:$0xff] %v428
    %517 = vst [vmem:[#allocation8 + $0x20] sm:$0xff] %v503
    %518 = vst [vmem:[#allocation8 + $0x28] sm:$0xff] %v505
    %519 = vst [vmem:[#allocation8 + $0x30] sm:$0xff] %v355
    %520 = vst [vmem:[#allocation8 + $0x38] sm:$0xff] %v357
    %521 = vst [vmem:[#allocation8 + $0x40] sm:$0xff] %v432
    %522 = vst [vmem:[#allocation8 + $0x48] sm:$0xff] %v434
    %523 = vst [vmem:[#allocation8 + $0x50] sm:$0xff] %v509
    %524 = vst [vmem:[#allocation8 + $0x58] sm:$0xff] %v511
    // Predicated region
    $region26: #{tpu_custom_call.1} parent=1 // pred_check
      _
    $region27: #{tpu_custom_call.1} parent=1 // pred_check_branch
      %526 = sbr.rel (0) target = $region29
    $region28: #{tpu_custom_call.1} parent=1 // pred_region
      %s528 = ssub.s32 1536, 1536
      %529 = vsyncadd [#allocation4], %s528
      %s530 = sshll.u32 [#allocation8], 4
      %s531 = int_to_ptr.vmem [resolvable:$true] %s530
      %536 = dma.vmem_to_hbm [thread:$0]  %s531, 1536, %s3, [#allocation4], 768, 768, 48
    $region29: #{tpu_custom_call.1} parent=1 // pred_fallthru
      _
    // Predicated region
    $region30: #{tpu_custom_call.1} parent=1 // pred_check
      _
    $region31: #{tpu_custom_call.1} parent=1 // pred_check_branch
      %538 = sbr.rel (0) target = $region33
    $region32: #{tpu_custom_call.1} parent=1 // pred_region
      %539 = dma.done [#allocation4], 1536
    $region33: #{tpu_custom_call.1} parent=1 // pred_fallthru
      _
    %540 = vsyncpa [#allocation3], 1
    %541 = vsyncpa [#allocation6], 1
    %542 = vsyncpa [#allocation4], 1

</llo_original>
